<compile_context>
chip_gen: v7x
topology: tpu7x:2x2x1
jax: 0.10.0
libtpu: 0.0.40
codegen_flags: <defaults>
</compile_context>

<pallas_src>
import jax
import jax.numpy as jnp
from jax.experimental import pallas as pl
from jax.experimental.pallas import tpu as pltpu

# ---- small synthetic shapes (consistent with the forward's semantics) -------
B, T, F = 2, 8, 32       # batch, time frames, freq bins
C = 8                    # conv output channels
D = C * F                # per-frame feature dim fed to the DNN (256)
H = 32                   # DNN hidden width

N_STREAM = 2             # original + reconstruction, stacked on the row axis
HALF = B * T             # rows per stream (16)
NT = N_STREAM * HALF     # total rows (32)
W = C * F                # lane-dense conv width (256)


# --------------------------- fused forward + loss -----------------------------
def _fused_mos_loss_kernel(x_ref, wv_ref, bv_ref, w1_ref, b1_ref, w2_ref, b2_ref,
                           o_ref):
    # x_ref : (NT, F)   stacked frames; row = stream*B*T + b*T + t
    # wv_ref: (9, W)    conv filters broadcast over freq: wv[k, c*F + f] = w[c, k]
    # bv_ref: (1, W)    conv bias broadcast over freq
    # w1_ref: (D, H), b1_ref: (1, H), w2_ref: (1, H), b2_ref: (1, 1)
    # o_ref : (1, 1)    scalar loss
    x = x_ref[...]                                        # (NT, F)
    # replicate the single input channel C times along lanes -> lane-dense width
    xw = jnp.concatenate([x] * C, axis=-1)                # (NT, W)

    ti = jax.lax.broadcasted_iota(jnp.int32, (NT, W), 0) % T   # frame idx in utterance
    fi = jax.lax.broadcasted_iota(jnp.int32, (NT, W), 1) % F   # freq idx in channel block

    wv = wv_ref[...]                                      # (9, W)
    zrow = jnp.zeros((1, W), jnp.float32)
    acc = jnp.zeros((NT, W), jnp.float32)

    k = 0
    for dy in (-1, 0, 1):
        # time tap: shift rows (sublane axis); the mask below zeroes both the
        # array edges and the cross-utterance bleed (implicit zero padding).
        if dy == -1:
            y_t = jnp.concatenate([zrow, xw[:-1, :]], axis=0)
        elif dy == 1:
            y_t = jnp.concatenate([xw[1:, :], zrow], axis=0)
        else:
            y_t = xw
        valid_t = jnp.logical_and(ti + dy >= 0, ti + dy < T)
        for dx in (-1, 0, 1):
            # frequency tap: lane rotation on the XLU + mask of wrapped lanes
            if dx == 0:
                y = y_t
                valid = valid_t
            else:
                y = pltpu.roll(y_t, shift=(-dx) % W, axis=1)
                valid = jnp.logical_and(
                    valid_t, jnp.logical_and(fi + dx >= 0, fi + dx < F))
            shifted = jnp.where(valid, y, 0.0)
            acc = acc + wv[k:k + 1, :] * shifted          # all C channels at once
            k += 1

    # hooked 'conv' activation, lane-dense (rows, C*F); row r, lane c*F+f equals
    # the NCHW activation [b, c, t, f] -> elementwise MSE is identical, and this
    # IS the per-frame feature vector (c-major flatten) the DNN consumes.
    conv_act = jnp.maximum(acc + bv_ref[...], 0.0)        # (NT, W)

    # mean_net_dnn on both streams at once (M = 2*B*T rows)
    h = jnp.dot(conv_act, w1_ref[...], preferred_element_type=jnp.float32)
    h = jnp.maximum(h + b1_ref[...], 0.0)                 # (NT, H)
    frame = jnp.sum(h * w2_ref[...], axis=-1, keepdims=True) + b2_ref[...]  # (NT, 1) 'dnn'

    # squared-error terms: original rows [0, HALF) vs reconstruction rows [HALF, NT)
    cdiff = conv_act[:HALF, :] - conv_act[HALF:, :]       # (HALF, W)
    ddiff = frame[:HALF, :] - frame[HALF:, :]             # (HALF, 1)

    conv_mse = jnp.sum(cdiff * cdiff) * (1.0 / (HALF * W))   # over B*C*T*F elems
    dnn_mse = jnp.sum(ddiff * ddiff) * (1.0 / HALF)          # over B*T*1 elems

    # utterance scores: mean over T frames; MSE over the B per-utterance scores
    score_sq = 0.0
    for b in range(B):
        d_b = jnp.sum(ddiff[b * T:(b + 1) * T, :]) * (1.0 / T)
        score_sq = score_sq + d_b * d_b
    score_mse = score_sq * (1.0 / B)

    o_ref[...] = ((score_mse + conv_mse + dnn_mse) * (1.0 / 3.0)).reshape(1, 1)


def mos_activation_loss(original, reconstruction, params):
    # Stack both streams on the row axis so everything is ONE kernel launch.
    x = jnp.concatenate([original, reconstruction], axis=0).astype(jnp.float32)
    x = x.reshape(NT, F)
    # Expand conv params to lane-dense broadcast rows (tiny, one-time XLA ops).
    w9 = params["conv_w"].reshape(C, 9).T                       # (9, C), k = ky*3 + kx
    wv = jnp.repeat(w9, F, axis=1)                              # (9, C*F)
    bv = jnp.repeat(params["conv_b"], F).reshape(1, C * F)      # (1, C*F)
    out = pl.pallas_call(
        _fused_mos_loss_kernel,
        out_shape=jax.ShapeDtypeStruct((1, 1), jnp.float32),
    )(x, wv, bv,
      params["w1"], params["b1"].reshape(1, H),
      params["w2"].reshape(1, H), params["b2"].reshape(1, 1))
    return out[0, 0]


# ------------------------- pure-JAX reference (check) -------------------------
def _reference_loss(original, reconstruction, params):
    def forward(x):
        xp = jnp.pad(x, ((0, 0), (1, 1), (1, 1)))
        conv = jnp.stack(
            [sum(params["conv_w"][c, dy, dx] * xp[:, dy:dy + T, dx:dx + F]
                 for dy in range(3) for dx in range(3)) + params["conv_b"][c]
             for c in range(C)], axis=1)                        # (B, C, T, F)
        conv = jnp.maximum(conv, 0.0)                           # hooked 'conv'
        feat = jnp.transpose(conv, (0, 2, 1, 3)).reshape(B, T, C * F)
        h = jnp.maximum(
            jnp.dot(feat, params["w1"], precision=jax.lax.Precision.HIGHEST)
            + params["b1"], 0.0)
        frame = jnp.sum(h * params["w2"], axis=-1, keepdims=True) \
            + params["b2"][0, 0]                                # hooked 'dnn' (B, T, 1)
        score = jnp.mean(frame[..., 0], axis=-1)                # (B,)
        return score, conv, frame

    so, co, do_ = forward(original)
    sr, cr, dr = forward(reconstruction)
    mse = lambda a, b: jnp.mean((a - b) ** 2)
    return (mse(so, sr) + mse(co, cr) + mse(do_, dr)) / 3.0


# ------------------------------ params / main ----------------------------------
def init_params():
    k = jax.random.PRNGKey(1)
    ks = jax.random.split(k, 5)
    s = 0.1
    return dict(
        conv_w=s * jax.random.normal(ks[0], (C, 3, 3), jnp.float32),
        conv_b=s * jax.random.normal(ks[1], (C,), jnp.float32),
        w1=s * jax.random.normal(ks[2], (D, H), jnp.float32),
        b1=s * jax.random.normal(ks[3], (H,), jnp.float32),
        w2=s * jax.random.normal(ks[4], (H,), jnp.float32),
        b2=jnp.zeros((1, 1), jnp.float32),
    )


if __name__ == "__main__":
    key = jax.random.PRNGKey(0)
    k1, k2 = jax.random.split(key)
    original = jax.random.normal(k1, (B, T, F), jnp.float32)
    reconstruction = original + 0.1 * jax.random.normal(k2, (B, T, F), jnp.float32)

    params = init_params()
    loss = jax.jit(mos_activation_loss)(original, reconstruction, params)
    jax.block_until_ready(loss)

    ref = _reference_loss(original, reconstruction, params)
    assert loss.shape == () and jnp.isfinite(loss)
    assert jnp.allclose(loss, ref, rtol=1e-3, atol=1e-5), (loss, ref)
    print("KERNEL_OK")
</pallas_src>

<mosaic_0001>
module attributes {stable_mosaic.version = 11 : i64} {
  func.func @_fused_mos_loss_kernel(%arg0: memref<32x32xf32, #tpu.memory_space<vmem>>, %arg1: memref<9x256xf32, #tpu.memory_space<vmem>>, %arg2: memref<1x256xf32, #tpu.memory_space<vmem>>, %arg3: memref<256x32xf32, #tpu.memory_space<vmem>>, %arg4: memref<1x32xf32, #tpu.memory_space<vmem>>, %arg5: memref<1x32xf32, #tpu.memory_space<vmem>>, %arg6: memref<1x1xf32, #tpu.memory_space<vmem>>, %arg7: memref<1x1xf32, #tpu.memory_space<vmem>>) attributes {dimension_semantics = [], scalar_prefetch = 0 : i64, scratch_operands = 0 : i64, tpu.core_type = #tpu.core_type<tc>} {
    %c0 = arith.constant 0 : index
    %c0_0 = arith.constant 0 : index
    %0 = vector.load %arg0[%c0, %c0_0] : memref<32x32xf32, #tpu.memory_space<vmem>>, vector<32x32xf32>
    %1 = tpu.concatenate %0, %0, %0, %0, %0, %0, %0, %0 in 1 : vector<32x32xf32>, vector<32x32xf32>, vector<32x32xf32>, vector<32x32xf32>, vector<32x32xf32>, vector<32x32xf32>, vector<32x32xf32>, vector<32x32xf32> -> vector<32x256xf32>
    %2 = tpu.iota {dimensions = array<i32: 0>} : vector<32x256xi32>
    %c8_i32 = arith.constant 8 : i32
    %c0_i32 = arith.constant 0 : i32
    %3 = arith.cmpi eq, %c8_i32, %c0_i32 : i32
    %c1_i32 = arith.constant 1 : i32
    %4 = arith.select %3, %c1_i32, %c8_i32 : i32
    %5 = vector.broadcast %4 : i32 to vector<32x256xi32>
    %6 = arith.remsi %2, %5 : vector<32x256xi32>
    %c0_i32_1 = arith.constant 0 : i32
    %7 = vector.broadcast %c0_i32_1 : i32 to vector<32x256xi32>
    %8 = arith.cmpi ne, %6, %7 : vector<32x256xi32>
    %c0_i32_2 = arith.constant 0 : i32
    %9 = vector.broadcast %c0_i32_2 : i32 to vector<32x256xi32>
    %10 = arith.cmpi slt, %6, %9 : vector<32x256xi32>
    %c0_i32_3 = arith.constant 0 : i32
    %11 = arith.cmpi slt, %4, %c0_i32_3 : i32
    %12 = vector.broadcast %11 : i1 to vector<32x256xi1>
    %13 = vector.broadcast %12 : vector<32x256xi1> to vector<32x256xi1>
    %14 = arith.xori %10, %13 : vector<32x256xi1>
    %15 = arith.andi %14, %8 : vector<32x256xi1>
    %16 = vector.broadcast %4 : i32 to vector<32x256xi32>
    %17 = arith.addi %6, %16 : vector<32x256xi32>
    %18 = arith.select %15, %17, %6 : vector<32x256xi1>, vector<32x256xi32>
    %19 = tpu.iota {dimensions = array<i32: 1>} : vector<32x256xi32>
    %c32_i32 = arith.constant 32 : i32
    %c0_i32_4 = arith.constant 0 : i32
    %20 = arith.cmpi eq, %c32_i32, %c0_i32_4 : i32
    %c1_i32_5 = arith.constant 1 : i32
    %21 = arith.select %20, %c1_i32_5, %c32_i32 : i32
    %22 = vector.broadcast %21 : i32 to vector<32x256xi32>
    %23 = arith.remsi %19, %22 : vector<32x256xi32>
    %c0_i32_6 = arith.constant 0 : i32
    %24 = vector.broadcast %c0_i32_6 : i32 to vector<32x256xi32>
    %25 = arith.cmpi ne, %23, %24 : vector<32x256xi32>
    %c0_i32_7 = arith.constant 0 : i32
    %26 = vector.broadcast %c0_i32_7 : i32 to vector<32x256xi32>
    %27 = arith.cmpi slt, %23, %26 : vector<32x256xi32>
    %c0_i32_8 = arith.constant 0 : i32
    %28 = arith.cmpi slt, %21, %c0_i32_8 : i32
    %29 = vector.broadcast %28 : i1 to vector<32x256xi1>
    %30 = vector.broadcast %29 : vector<32x256xi1> to vector<32x256xi1>
    %31 = arith.xori %27, %30 : vector<32x256xi1>
    %32 = arith.andi %31, %25 : vector<32x256xi1>
    %33 = vector.broadcast %21 : i32 to vector<32x256xi32>
    %34 = arith.addi %23, %33 : vector<32x256xi32>
    %35 = arith.select %32, %34, %23 : vector<32x256xi1>, vector<32x256xi32>
    %c0_9 = arith.constant 0 : index
    %c0_10 = arith.constant 0 : index
    %36 = vector.load %arg1[%c0_9, %c0_10] : memref<9x256xf32, #tpu.memory_space<vmem>>, vector<9x256xf32>
    %cst = arith.constant 0.000000e+00 : f32
    %37 = vector.broadcast %cst : f32 to vector<1x256xf32>
    %cst_11 = arith.constant 0.000000e+00 : f32
    %38 = vector.broadcast %cst_11 : f32 to vector<32x256xf32>
    %39 = vector.extract_strided_slice %1 {offsets = [0, 0], sizes = [31, 256], strides = [1, 1]} : vector<32x256xf32> to vector<31x256xf32>
    %40 = tpu.concatenate %37, %39 in 0 : vector<1x256xf32>, vector<31x256xf32> -> vector<32x256xf32>
    %c-1_i32 = arith.constant -1 : i32
    %41 = vector.broadcast %c-1_i32 : i32 to vector<32x256xi32>
    %42 = arith.addi %18, %41 : vector<32x256xi32>
    %c0_i32_12 = arith.constant 0 : i32
    %43 = vector.broadcast %c0_i32_12 : i32 to vector<32x256xi32>
    %44 = arith.cmpi sge, %42, %43 : vector<32x256xi32>
    %c-1_i32_13 = arith.constant -1 : i32
    %45 = vector.broadcast %c-1_i32_13 : i32 to vector<32x256xi32>
    %46 = arith.addi %18, %45 : vector<32x256xi32>
    %c8_i32_14 = arith.constant 8 : i32
    %47 = vector.broadcast %c8_i32_14 : i32 to vector<32x256xi32>
    %48 = arith.cmpi slt, %46, %47 : vector<32x256xi32>
    %49 = arith.andi %44, %48 : vector<32x256xi1>
    %c1_i32_15 = arith.constant 1 : i32
    %50 = tpu.dynamic_rotate %40 by %c1_i32_15 dim 1 : vector<32x256xf32>, i32 -> vector<32x256xf32>
    %c-1_i32_16 = arith.constant -1 : i32
    %51 = vector.broadcast %c-1_i32_16 : i32 to vector<32x256xi32>
    %52 = arith.addi %35, %51 : vector<32x256xi32>
    %c0_i32_17 = arith.constant 0 : i32
    %53 = vector.broadcast %c0_i32_17 : i32 to vector<32x256xi32>
    %54 = arith.cmpi sge, %52, %53 : vector<32x256xi32>
    %c-1_i32_18 = arith.constant -1 : i32
    %55 = vector.broadcast %c-1_i32_18 : i32 to vector<32x256xi32>
    %56 = arith.addi %35, %55 : vector<32x256xi32>
    %c32_i32_19 = arith.constant 32 : i32
    %57 = vector.broadcast %c32_i32_19 : i32 to vector<32x256xi32>
    %58 = arith.cmpi slt, %56, %57 : vector<32x256xi32>
    %59 = arith.andi %54, %58 : vector<32x256xi1>
    %60 = arith.andi %49, %59 : vector<32x256xi1>
    %cst_20 = arith.constant 0.000000e+00 : f32
    %61 = vector.broadcast %cst_20 : f32 to vector<32x256xf32>
    %62 = arith.select %60, %50, %61 : vector<32x256xi1>, vector<32x256xf32>
    %63 = vector.extract_strided_slice %36 {offsets = [0, 0], sizes = [1, 256], strides = [1, 1]} : vector<9x256xf32> to vector<1x256xf32>
    %64 = vector.broadcast %63 : vector<1x256xf32> to vector<32x256xf32>
    %65 = arith.mulf %64, %62 : vector<32x256xf32>
    %66 = arith.addf %38, %65 : vector<32x256xf32>
    %cst_21 = arith.constant 0.000000e+00 : f32
    %67 = vector.broadcast %cst_21 : f32 to vector<32x256xf32>
    %68 = arith.select %49, %40, %67 : vector<32x256xi1>, vector<32x256xf32>
    %69 = vector.extract_strided_slice %36 {offsets = [1, 0], sizes = [1, 256], strides = [1, 1]} : vector<9x256xf32> to vector<1x256xf32>
    %70 = vector.broadcast %69 : vector<1x256xf32> to vector<32x256xf32>
    %71 = arith.mulf %70, %68 : vector<32x256xf32>
    %72 = arith.addf %66, %71 : vector<32x256xf32>
    %c255_i32 = arith.constant 255 : i32
    %73 = tpu.dynamic_rotate %40 by %c255_i32 dim 1 : vector<32x256xf32>, i32 -> vector<32x256xf32>
    %c1_i32_22 = arith.constant 1 : i32
    %74 = vector.broadcast %c1_i32_22 : i32 to vector<32x256xi32>
    %75 = arith.addi %35, %74 : vector<32x256xi32>
    %c0_i32_23 = arith.constant 0 : i32
    %76 = vector.broadcast %c0_i32_23 : i32 to vector<32x256xi32>
    %77 = arith.cmpi sge, %75, %76 : vector<32x256xi32>
    %c1_i32_24 = arith.constant 1 : i32
    %78 = vector.broadcast %c1_i32_24 : i32 to vector<32x256xi32>
    %79 = arith.addi %35, %78 : vector<32x256xi32>
    %c32_i32_25 = arith.constant 32 : i32
    %80 = vector.broadcast %c32_i32_25 : i32 to vector<32x256xi32>
    %81 = arith.cmpi slt, %79, %80 : vector<32x256xi32>
    %82 = arith.andi %77, %81 : vector<32x256xi1>
    %83 = arith.andi %49, %82 : vector<32x256xi1>
    %cst_26 = arith.constant 0.000000e+00 : f32
    %84 = vector.broadcast %cst_26 : f32 to vector<32x256xf32>
    %85 = arith.select %83, %73, %84 : vector<32x256xi1>, vector<32x256xf32>
    %86 = vector.extract_strided_slice %36 {offsets = [2, 0], sizes = [1, 256], strides = [1, 1]} : vector<9x256xf32> to vector<1x256xf32>
    %87 = vector.broadcast %86 : vector<1x256xf32> to vector<32x256xf32>
    %88 = arith.mulf %87, %85 : vector<32x256xf32>
    %89 = arith.addf %72, %88 : vector<32x256xf32>
    %c0_i32_27 = arith.constant 0 : i32
    %90 = vector.broadcast %c0_i32_27 : i32 to vector<32x256xi32>
    %91 = arith.addi %18, %90 : vector<32x256xi32>
    %c0_i32_28 = arith.constant 0 : i32
    %92 = vector.broadcast %c0_i32_28 : i32 to vector<32x256xi32>
    %93 = arith.cmpi sge, %91, %92 : vector<32x256xi32>
    %c0_i32_29 = arith.constant 0 : i32
    %94 = vector.broadcast %c0_i32_29 : i32 to vector<32x256xi32>
    %95 = arith.addi %18, %94 : vector<32x256xi32>
    %c8_i32_30 = arith.constant 8 : i32
    %96 = vector.broadcast %c8_i32_30 : i32 to vector<32x256xi32>
    %97 = arith.cmpi slt, %95, %96 : vector<32x256xi32>
    %98 = arith.andi %93, %97 : vector<32x256xi1>
    %c1_i32_31 = arith.constant 1 : i32
    %99 = tpu.dynamic_rotate %1 by %c1_i32_31 dim 1 : vector<32x256xf32>, i32 -> vector<32x256xf32>
    %c-1_i32_32 = arith.constant -1 : i32
    %100 = vector.broadcast %c-1_i32_32 : i32 to vector<32x256xi32>
    %101 = arith.addi %35, %100 : vector<32x256xi32>
    %c0_i32_33 = arith.constant 0 : i32
    %102 = vector.broadcast %c0_i32_33 : i32 to vector<32x256xi32>
    %103 = arith.cmpi sge, %101, %102 : vector<32x256xi32>
    %c-1_i32_34 = arith.constant -1 : i32
    %104 = vector.broadcast %c-1_i32_34 : i32 to vector<32x256xi32>
    %105 = arith.addi %35, %104 : vector<32x256xi32>
    %c32_i32_35 = arith.constant 32 : i32
    %106 = vector.broadcast %c32_i32_35 : i32 to vector<32x256xi32>
    %107 = arith.cmpi slt, %105, %106 : vector<32x256xi32>
    %108 = arith.andi %103, %107 : vector<32x256xi1>
    %109 = arith.andi %98, %108 : vector<32x256xi1>
    %cst_36 = arith.constant 0.000000e+00 : f32
    %110 = vector.broadcast %cst_36 : f32 to vector<32x256xf32>
    %111 = arith.select %109, %99, %110 : vector<32x256xi1>, vector<32x256xf32>
    %112 = vector.extract_strided_slice %36 {offsets = [3, 0], sizes = [1, 256], strides = [1, 1]} : vector<9x256xf32> to vector<1x256xf32>
    %113 = vector.broadcast %112 : vector<1x256xf32> to vector<32x256xf32>
    %114 = arith.mulf %113, %111 : vector<32x256xf32>
    %115 = arith.addf %89, %114 : vector<32x256xf32>
    %cst_37 = arith.constant 0.000000e+00 : f32
    %116 = vector.broadcast %cst_37 : f32 to vector<32x256xf32>
    %117 = arith.select %98, %1, %116 : vector<32x256xi1>, vector<32x256xf32>
    %118 = vector.extract_strided_slice %36 {offsets = [4, 0], sizes = [1, 256], strides = [1, 1]} : vector<9x256xf32> to vector<1x256xf32>
    %119 = vector.broadcast %118 : vector<1x256xf32> to vector<32x256xf32>
    %120 = arith.mulf %119, %117 : vector<32x256xf32>
    %121 = arith.addf %115, %120 : vector<32x256xf32>
    %c255_i32_38 = arith.constant 255 : i32
    %122 = tpu.dynamic_rotate %1 by %c255_i32_38 dim 1 : vector<32x256xf32>, i32 -> vector<32x256xf32>
    %c1_i32_39 = arith.constant 1 : i32
    %123 = vector.broadcast %c1_i32_39 : i32 to vector<32x256xi32>
    %124 = arith.addi %35, %123 : vector<32x256xi32>
    %c0_i32_40 = arith.constant 0 : i32
    %125 = vector.broadcast %c0_i32_40 : i32 to vector<32x256xi32>
    %126 = arith.cmpi sge, %124, %125 : vector<32x256xi32>
    %c1_i32_41 = arith.constant 1 : i32
    %127 = vector.broadcast %c1_i32_41 : i32 to vector<32x256xi32>
    %128 = arith.addi %35, %127 : vector<32x256xi32>
    %c32_i32_42 = arith.constant 32 : i32
    %129 = vector.broadcast %c32_i32_42 : i32 to vector<32x256xi32>
    %130 = arith.cmpi slt, %128, %129 : vector<32x256xi32>
    %131 = arith.andi %126, %130 : vector<32x256xi1>
    %132 = arith.andi %98, %131 : vector<32x256xi1>
    %cst_43 = arith.constant 0.000000e+00 : f32
    %133 = vector.broadcast %cst_43 : f32 to vector<32x256xf32>
    %134 = arith.select %132, %122, %133 : vector<32x256xi1>, vector<32x256xf32>
    %135 = vector.extract_strided_slice %36 {offsets = [5, 0], sizes = [1, 256], strides = [1, 1]} : vector<9x256xf32> to vector<1x256xf32>
    %136 = vector.broadcast %135 : vector<1x256xf32> to vector<32x256xf32>
    %137 = arith.mulf %136, %134 : vector<32x256xf32>
    %138 = arith.addf %121, %137 : vector<32x256xf32>
    %139 = vector.extract_strided_slice %1 {offsets = [1, 0], sizes = [31, 256], strides = [1, 1]} : vector<32x256xf32> to vector<31x256xf32>
    %140 = tpu.concatenate %139, %37 in 0 : vector<31x256xf32>, vector<1x256xf32> -> vector<32x256xf32>
    %c1_i32_44 = arith.constant 1 : i32
    %141 = vector.broadcast %c1_i32_44 : i32 to vector<32x256xi32>
    %142 = arith.addi %18, %141 : vector<32x256xi32>
    %c0_i32_45 = arith.constant 0 : i32
    %143 = vector.broadcast %c0_i32_45 : i32 to vector<32x256xi32>
    %144 = arith.cmpi sge, %142, %143 : vector<32x256xi32>
    %c1_i32_46 = arith.constant 1 : i32
    %145 = vector.broadcast %c1_i32_46 : i32 to vector<32x256xi32>
    %146 = arith.addi %18, %145 : vector<32x256xi32>
    %c8_i32_47 = arith.constant 8 : i32
    %147 = vector.broadcast %c8_i32_47 : i32 to vector<32x256xi32>
    %148 = arith.cmpi slt, %146, %147 : vector<32x256xi32>
    %149 = arith.andi %144, %148 : vector<32x256xi1>
    %c1_i32_48 = arith.constant 1 : i32
    %150 = tpu.dynamic_rotate %140 by %c1_i32_48 dim 1 : vector<32x256xf32>, i32 -> vector<32x256xf32>
    %c-1_i32_49 = arith.constant -1 : i32
    %151 = vector.broadcast %c-1_i32_49 : i32 to vector<32x256xi32>
    %152 = arith.addi %35, %151 : vector<32x256xi32>
    %c0_i32_50 = arith.constant 0 : i32
    %153 = vector.broadcast %c0_i32_50 : i32 to vector<32x256xi32>
    %154 = arith.cmpi sge, %152, %153 : vector<32x256xi32>
    %c-1_i32_51 = arith.constant -1 : i32
    %155 = vector.broadcast %c-1_i32_51 : i32 to vector<32x256xi32>
    %156 = arith.addi %35, %155 : vector<32x256xi32>
    %c32_i32_52 = arith.constant 32 : i32
    %157 = vector.broadcast %c32_i32_52 : i32 to vector<32x256xi32>
    %158 = arith.cmpi slt, %156, %157 : vector<32x256xi32>
    %159 = arith.andi %154, %158 : vector<32x256xi1>
    %160 = arith.andi %149, %159 : vector<32x256xi1>
    %cst_53 = arith.constant 0.000000e+00 : f32
    %161 = vector.broadcast %cst_53 : f32 to vector<32x256xf32>
    %162 = arith.select %160, %150, %161 : vector<32x256xi1>, vector<32x256xf32>
    %163 = vector.extract_strided_slice %36 {offsets = [6, 0], sizes = [1, 256], strides = [1, 1]} : vector<9x256xf32> to vector<1x256xf32>
    %164 = vector.broadcast %163 : vector<1x256xf32> to vector<32x256xf32>
    %165 = arith.mulf %164, %162 : vector<32x256xf32>
    %166 = arith.addf %138, %165 : vector<32x256xf32>
    %cst_54 = arith.constant 0.000000e+00 : f32
    %167 = vector.broadcast %cst_54 : f32 to vector<32x256xf32>
    %168 = arith.select %149, %140, %167 : vector<32x256xi1>, vector<32x256xf32>
    %169 = vector.extract_strided_slice %36 {offsets = [7, 0], sizes = [1, 256], strides = [1, 1]} : vector<9x256xf32> to vector<1x256xf32>
    %170 = vector.broadcast %169 : vector<1x256xf32> to vector<32x256xf32>
    %171 = arith.mulf %170, %168 : vector<32x256xf32>
    %172 = arith.addf %166, %171 : vector<32x256xf32>
    %c255_i32_55 = arith.constant 255 : i32
    %173 = tpu.dynamic_rotate %140 by %c255_i32_55 dim 1 : vector<32x256xf32>, i32 -> vector<32x256xf32>
    %c1_i32_56 = arith.constant 1 : i32
    %174 = vector.broadcast %c1_i32_56 : i32 to vector<32x256xi32>
    %175 = arith.addi %35, %174 : vector<32x256xi32>
    %c0_i32_57 = arith.constant 0 : i32
    %176 = vector.broadcast %c0_i32_57 : i32 to vector<32x256xi32>
    %177 = arith.cmpi sge, %175, %176 : vector<32x256xi32>
    %c1_i32_58 = arith.constant 1 : i32
    %178 = vector.broadcast %c1_i32_58 : i32 to vector<32x256xi32>
    %179 = arith.addi %35, %178 : vector<32x256xi32>
    %c32_i32_59 = arith.constant 32 : i32
    %180 = vector.broadcast %c32_i32_59 : i32 to vector<32x256xi32>
    %181 = arith.cmpi slt, %179, %180 : vector<32x256xi32>
    %182 = arith.andi %177, %181 : vector<32x256xi1>
    %183 = arith.andi %149, %182 : vector<32x256xi1>
    %cst_60 = arith.constant 0.000000e+00 : f32
    %184 = vector.broadcast %cst_60 : f32 to vector<32x256xf32>
    %185 = arith.select %183, %173, %184 : vector<32x256xi1>, vector<32x256xf32>
    %186 = vector.extract_strided_slice %36 {offsets = [8, 0], sizes = [1, 256], strides = [1, 1]} : vector<9x256xf32> to vector<1x256xf32>
    %187 = vector.broadcast %186 : vector<1x256xf32> to vector<32x256xf32>
    %188 = arith.mulf %187, %185 : vector<32x256xf32>
    %189 = arith.addf %172, %188 : vector<32x256xf32>
    %c0_61 = arith.constant 0 : index
    %c0_62 = arith.constant 0 : index
    %190 = vector.load %arg2[%c0_61, %c0_62] : memref<1x256xf32, #tpu.memory_space<vmem>>, vector<1x256xf32>
    %191 = vector.broadcast %190 : vector<1x256xf32> to vector<32x256xf32>
    %192 = arith.addf %189, %191 : vector<32x256xf32>
    %cst_63 = arith.constant 0.000000e+00 : f32
    %193 = vector.broadcast %cst_63 : f32 to vector<32x256xf32>
    %194 = arith.maximumf %192, %193 : vector<32x256xf32>
    %c0_64 = arith.constant 0 : index
    %c0_65 = arith.constant 0 : index
    %195 = vector.load %arg3[%c0_64, %c0_65] : memref<256x32xf32, #tpu.memory_space<vmem>>, vector<256x32xf32>
    %cst_66 = arith.constant dense<0.000000e+00> : vector<32x32xf32>
    %196 = tpu.matmul %194, %195, %cst_66 {dimension_numbers = #tpu.dot_dimension_numbers<[1], [0], [0], [1], [0, 0, 1, 1], [], []>} : vector<32x256xf32>, vector<256x32xf32>, vector<32x32xf32> -> vector<32x32xf32>
    %c0_67 = arith.constant 0 : index
    %c0_68 = arith.constant 0 : index
    %197 = vector.load %arg4[%c0_67, %c0_68] : memref<1x32xf32, #tpu.memory_space<vmem>>, vector<1x32xf32>
    %198 = vector.broadcast %197 : vector<1x32xf32> to vector<32x32xf32>
    %199 = arith.addf %196, %198 : vector<32x32xf32>
    %cst_69 = arith.constant 0.000000e+00 : f32
    %200 = vector.broadcast %cst_69 : f32 to vector<32x32xf32>
    %201 = arith.maximumf %199, %200 : vector<32x32xf32>
    %c0_70 = arith.constant 0 : index
    %c0_71 = arith.constant 0 : index
    %202 = vector.load %arg5[%c0_70, %c0_71] : memref<1x32xf32, #tpu.memory_space<vmem>>, vector<1x32xf32>
    %203 = vector.broadcast %202 : vector<1x32xf32> to vector<32x32xf32>
    %204 = arith.mulf %201, %203 : vector<32x32xf32>
    %cst_72 = arith.constant dense<0.000000e+00> : vector<32xf32>
    %205 = vector.multi_reduction <add>, %204, %cst_72 [1] : vector<32x32xf32> to vector<32xf32>
    %206 = vector.shape_cast %205 : vector<32xf32> to vector<32x1xf32>
    %c0_73 = arith.constant 0 : index
    %c0_74 = arith.constant 0 : index
    %207 = vector.load %arg6[%c0_73, %c0_74] : memref<1x1xf32, #tpu.memory_space<vmem>>, vector<1x1xf32>
    %208 = vector.broadcast %207 : vector<1x1xf32> to vector<32x1xf32>
    %209 = arith.addf %206, %208 : vector<32x1xf32>
    %210 = vector.extract_strided_slice %194 {offsets = [0, 0], sizes = [16, 256], strides = [1, 1]} : vector<32x256xf32> to vector<16x256xf32>
    %211 = vector.extract_strided_slice %194 {offsets = [16, 0], sizes = [16, 256], strides = [1, 1]} : vector<32x256xf32> to vector<16x256xf32>
    %212 = arith.subf %210, %211 : vector<16x256xf32>
    %213 = vector.extract_strided_slice %209 {offsets = [0, 0], sizes = [16, 1], strides = [1, 1]} : vector<32x1xf32> to vector<16x1xf32>
    %214 = vector.extract_strided_slice %209 {offsets = [16, 0], sizes = [16, 1], strides = [1, 1]} : vector<32x1xf32> to vector<16x1xf32>
    %215 = arith.subf %213, %214 : vector<16x1xf32>
    %216 = arith.mulf %212, %212 : vector<16x256xf32>
    %217 = vector.shape_cast %216 : vector<16x256xf32> to vector<1x16x256xf32>
    %cst_75 = arith.constant dense<0.000000e+00> : vector<1xf32>
    %218 = vector.multi_reduction <add>, %217, %cst_75 [1, 2] : vector<1x16x256xf32> to vector<1xf32>
    %219 = vector.shape_cast %218 : vector<1xf32> to vector<1x1x1xf32>
    %220 = vector.extract %219[0, 0, 0] : f32 from vector<1x1x1xf32>
    %cst_76 = arith.constant 2.44140625E-4 : f32
    %221 = arith.mulf %220, %cst_76 : f32
    %222 = arith.mulf %215, %215 : vector<16x1xf32>
    %223 = vector.shape_cast %222 : vector<16x1xf32> to vector<1x16x1xf32>
    %cst_77 = arith.constant dense<0.000000e+00> : vector<1xf32>
    %224 = vector.multi_reduction <add>, %223, %cst_77 [1, 2] : vector<1x16x1xf32> to vector<1xf32>
    %225 = vector.shape_cast %224 : vector<1xf32> to vector<1x1x1xf32>
    %226 = vector.extract %225[0, 0, 0] : f32 from vector<1x1x1xf32>
    %cst_78 = arith.constant 6.250000e-02 : f32
    %227 = arith.mulf %226, %cst_78 : f32
    %228 = vector.extract_strided_slice %215 {offsets = [0, 0], sizes = [8, 1], strides = [1, 1]} : vector<16x1xf32> to vector<8x1xf32>
    %229 = vector.shape_cast %228 : vector<8x1xf32> to vector<1x8x1xf32>
    %cst_79 = arith.constant dense<0.000000e+00> : vector<1xf32>
    %230 = vector.multi_reduction <add>, %229, %cst_79 [1, 2] : vector<1x8x1xf32> to vector<1xf32>
    %231 = vector.shape_cast %230 : vector<1xf32> to vector<1x1x1xf32>
    %232 = vector.extract %231[0, 0, 0] : f32 from vector<1x1x1xf32>
    %cst_80 = arith.constant 1.250000e-01 : f32
    %233 = arith.mulf %232, %cst_80 : f32
    %234 = arith.mulf %233, %233 : f32
    %cst_81 = arith.constant 0.000000e+00 : f32
    %235 = arith.addf %cst_81, %234 : f32
    %236 = vector.extract_strided_slice %215 {offsets = [8, 0], sizes = [8, 1], strides = [1, 1]} : vector<16x1xf32> to vector<8x1xf32>
    %237 = vector.shape_cast %236 : vector<8x1xf32> to vector<1x8x1xf32>
    %cst_82 = arith.constant dense<0.000000e+00> : vector<1xf32>
    %238 = vector.multi_reduction <add>, %237, %cst_82 [1, 2] : vector<1x8x1xf32> to vector<1xf32>
    %239 = vector.shape_cast %238 : vector<1xf32> to vector<1x1x1xf32>
    %240 = vector.extract %239[0, 0, 0] : f32 from vector<1x1x1xf32>
    %cst_83 = arith.constant 1.250000e-01 : f32
    %241 = arith.mulf %240, %cst_83 : f32
    %242 = arith.mulf %241, %241 : f32
    %243 = arith.addf %235, %242 : f32
    %cst_84 = arith.constant 5.000000e-01 : f32
    %244 = arith.mulf %243, %cst_84 : f32
    %245 = arith.addf %244, %221 : f32
    %246 = arith.addf %245, %227 : f32
    %cst_85 = arith.constant 0.333333343 : f32
    %247 = arith.mulf %246, %cst_85 : f32
    %248 = vector.broadcast %247 : f32 to vector<1x1xf32>
    %c0_86 = arith.constant 0 : index
    %c0_87 = arith.constant 0 : index
    %249 = vector.load %arg7[%c0_86, %c0_87] : memref<1x1xf32, #tpu.memory_space<vmem>>, vector<1x1xf32>
    tpu.vector_store %arg7[%c0_86, %c0_87], %248 {strides = array<i32>} : memref<1x1xf32, #tpu.memory_space<vmem>>, vector<1x1xf32>,
    return
  }
}

</mosaic_0001>

<llo_original>
// kernel: mos_activation_loss.1
$region0: #{mos_activation_loss.1}
  #allocation0 [shape = 'u32[]', space=smem, size = 0x4, offset = 0x4, fixed_abs, tag = 'smem constant byte address 0x4 - core index']
  #allocation1 [shape = 'u32[144,128]{1,0:T(1,128)}', space=vmem, size = 0x12000, scoped, tag = 'internal scratch']
  #allocation2 [shape = 'f32[1,1]{1,0:T(1,128)S(1)}', space=vmem, size = 0x200, scoped, tag = 'scoped memory for mos_activation_loss.1']
  %s0 = inlined_call_operand.vmem [shape: f32[32,32], index: 0, kind: input, shape index: {}]
  %s1 = inlined_call_operand.vmem [shape: f32[9,256], index: 1, kind: input, shape index: {}]
  %s2 = inlined_call_operand.vmem [shape: f32[1,256], index: 2, kind: input, shape index: {}]
  %s3 = inlined_call_operand.vmem [shape: f32[256,32], index: 3, kind: input, shape index: {}]
  %s4 = inlined_call_operand.vmem [shape: f32[1,32], index: 4, kind: input, shape index: {}]
  %s5 = inlined_call_operand.vmem [shape: f32[1,32], index: 5, kind: input, shape index: {}]
  %s6 = inlined_call_operand.<no memory space> [shape: f32[1,1], index: 6, kind: input, shape index: {}]
  %s7 = inlined_call_operand.hbm [shape: f32[1,1], index: 7, kind: output, shape index: {}]
  %s8 = sld [smem:[#allocation0]]
  $region38: #{mos_activation_loss.1} parent=0
    _
  %s10 = ssub.s32 1, %s8
  %s11 = scalar_select 0, %s10, %s8
  %v12 = vstv %s6
  %13 = vst [vmem:[#allocation2] sm:$0x1] %v12
  $region1: #{mos_activation_loss.1} parent=0
    #allocation3 [shape = 'u8[512]{0}', space=vmem, size = 0x400, scoped, tag = 'output window, operand 0, single buffered']
    #allocation4 [shape = 's32[1]{0}', space=sflag, size = 0x4, scoped, tag = 'scoped memory for mos_activation_loss.1']
    %14 = vsyncpa [#allocation4], 0
    // Predicated region
    $region2: #{mos_activation_loss.1} parent=1 // pred_check
      _
    $region3: #{mos_activation_loss.1} parent=1 // pred_check_branch
      %16 = sbr.rel (0) target = $region5
    $region4: #{mos_activation_loss.1} parent=1 // pred_region
      _
    $region5: #{mos_activation_loss.1} parent=1 // pred_fallthru
      _
    // Predicated region
    $region6: #{mos_activation_loss.1} parent=1 // pred_check
      _
    $region7: #{mos_activation_loss.1} parent=1 // pred_check_branch
      %18 = sbr.rel (0) target = $region9
    $region8: #{mos_activation_loss.1} parent=1 // pred_region
      _
    $region9: #{mos_activation_loss.1} parent=1 // pred_fallthru
      _
    // Predicated region
    $region10: #{mos_activation_loss.1} parent=1 // pred_check
      _
    $region11: #{mos_activation_loss.1} parent=1 // pred_check_branch
      %20 = sbr.rel (0) target = $region13
    $region12: #{mos_activation_loss.1} parent=1 // pred_region
      _
    $region13: #{mos_activation_loss.1} parent=1 // pred_fallthru
      _
    // Predicated region
    $region14: #{mos_activation_loss.1} parent=1 // pred_check
      _
    $region15: #{mos_activation_loss.1} parent=1 // pred_check_branch
      %22 = sbr.rel (0) target = $region17
    $region16: #{mos_activation_loss.1} parent=1 // pred_region
      _
    $region17: #{mos_activation_loss.1} parent=1 // pred_fallthru
      _
    // Predicated region
    $region18: #{mos_activation_loss.1} parent=1 // pred_check
      _
    $region19: #{mos_activation_loss.1} parent=1 // pred_check_branch
      %24 = sbr.rel (0) target = $region21
    $region20: #{mos_activation_loss.1} parent=1 // pred_region
      _
    $region21: #{mos_activation_loss.1} parent=1 // pred_fallthru
      _
    // Predicated region
    $region22: #{mos_activation_loss.1} parent=1 // pred_check
      _
    $region23: #{mos_activation_loss.1} parent=1 // pred_check_branch
      %26 = sbr.rel (0) target = $region25
    $region24: #{mos_activation_loss.1} parent=1 // pred_region
      _
    $region25: #{mos_activation_loss.1} parent=1 // pred_fallthru
      _
    // Predicated region
    $region26: #{mos_activation_loss.1} parent=1 // pred_check
      _
    $region27: #{mos_activation_loss.1} parent=1 // pred_check_branch
      %28 = sbr.rel (0) target = $region29
    $region28: #{mos_activation_loss.1} parent=1 // pred_region
      _
    $region29: #{mos_activation_loss.1} parent=1 // pred_fallthru
      _
    %v29 = vld [vmem:[%s0] sm:$0xff]
    %v30 = vld [vmem:[%s0 + $0x8] sm:$0xff]
    %v31 = vld [vmem:[%s0 + $0x10] sm:$0xff]
    %v32 = vld [vmem:[%s0 + $0x18] sm:$0xff]
    %37 = vrot.lane.b32.xlu0 %v29, 32
    %v38 = vpop.permute.xlu0 %37
    %39 = vrot.lane.b32.xlu0 %v30, 32
    %v40 = vpop.permute.xlu0 %39
    %41 = vrot.lane.b32.xlu0 %v31, 32
    %v42 = vpop.permute.xlu0 %41
    %43 = vrot.lane.b32.xlu0 %v32, 32
    %v44 = vpop.permute.xlu0 %43
    %49 = vrot.lane.b32.xlu0 %v29, 64
    %v50 = vpop.permute.xlu0 %49
    %51 = vrot.lane.b32.xlu0 %v30, 64
    %v52 = vpop.permute.xlu0 %51
    %53 = vrot.lane.b32.xlu0 %v31, 64
    %v54 = vpop.permute.xlu0 %53
    %55 = vrot.lane.b32.xlu0 %v32, 64
    %v56 = vpop.permute.xlu0 %55
    %61 = vrot.lane.b32.xlu0 %v29, 96
    %v62 = vpop.permute.xlu0 %61
    %63 = vrot.lane.b32.xlu0 %v30, 96
    %v64 = vpop.permute.xlu0 %63
    %65 = vrot.lane.b32.xlu0 %v31, 96
    %v66 = vpop.permute.xlu0 %65
    %67 = vrot.lane.b32.xlu0 %v32, 96
    %v68 = vpop.permute.xlu0 %67
    %vm73 = vcmask 261120
    %v74 = vsel %vm73, %v29, %v38
    %v75 = vsel %vm73, %v30, %v40
    %v76 = vsel %vm73, %v31, %v42
    %v77 = vsel %vm73, %v32, %v44
    %vm78 = vcmask 523264
    %v79 = vsel %vm78, %v74, %v50
    %v80 = vsel %vm78, %v75, %v52
    %v81 = vsel %vm78, %v76, %v54
    %v82 = vsel %vm78, %v77, %v56
    %vm83 = vcmask 785408
    %v84 = vsel %vm83, %v79, %v62
    %v85 = vsel %vm83, %v80, %v64
    %v86 = vsel %vm83, %v81, %v66
    %v87 = vsel %vm83, %v82, %v68
    %v88 = vlaneseq
    %v89 = vshrl.u32 %v88, 7
    %v90 = vadd.s32 %v89, 8
    %v91 = vadd.s32 %v89, 16
    %v92 = vadd.s32 %v89, 24
    %vm93 = vcmp.lt.s32.totalorder %v89, 0
    %v94 = vsub.s32 0, %v89
    %v95 = vsel %vm93, %v94, %v89
    %v96 = vshrl.u32 %v95, 3
    %v97 = vand.u32 %v95, 7
    %v98 = vsub.s32 0, %v97
    %v99 = vsel %vm93, %v98, %v97
    %vm100 = vcmp.lt.s32.totalorder %v90, 0
    %v101 = vsub.s32 0, %v90
    %v102 = vsel %vm100, %v101, %v90
    %v103 = vshrl.u32 %v102, 3
    %v104 = vand.u32 %v102, 7
    %v105 = vsub.s32 0, %v104
    %v106 = vsel %vm100, %v105, %v104
    %vm107 = vcmp.lt.s32.totalorder %v91, 0
    %v108 = vsub.s32 0, %v91
    %v109 = vsel %vm107, %v108, %v91
    %v110 = vshrl.u32 %v109, 3
    %v111 = vand.u32 %v109, 7
    %v112 = vsub.s32 0, %v111
    %v113 = vsel %vm107, %v112, %v111
    %vm114 = vcmp.lt.s32.totalorder %v92, 0
    %v115 = vsub.s32 0, %v92
    %v116 = vsel %vm114, %v115, %v92
    %v117 = vshrl.u32 %v116, 3
    %v118 = vand.u32 %v116, 7
    %v119 = vsub.s32 0, %v118
    %v120 = vsel %vm114, %v119, %v118
    %vm121 = vcmp.ne.s32.totalorder %v99, 0
    %vm122 = vcmp.ne.s32.totalorder %v106, 0
    %vm123 = vcmp.ne.s32.totalorder %v113, 0
    %vm124 = vcmp.ne.s32.totalorder %v120, 0
    %vm125 = vcmp.lt.s32.totalorder %v99, 0
    %vm126 = vcmp.lt.s32.totalorder %v106, 0
    %vm127 = vcmp.lt.s32.totalorder %v113, 0
    %vm128 = vcmp.lt.s32.totalorder %v120, 0
    %vm129 = vmand %vm125, %vm121
    %vm130 = vmand %vm126, %vm122
    %vm131 = vmand %vm127, %vm123
    %vm132 = vmand %vm128, %vm124
    %v133 = vadd.s32 %v99, 8
    %v134 = vadd.s32 %v106, 8
    %v135 = vadd.s32 %v113, 8
    %v136 = vadd.s32 %v120, 8
    %v137 = vsel %vm129, %v133, %v99
    %v138 = vsel %vm130, %v134, %v106
    %v139 = vsel %vm131, %v135, %v113
    %v140 = vsel %vm132, %v136, %v120
    %v141 = vlaneseq
    %v142 = vand.u32 %v141, 127
    %v143 = vadd.s32 %v142, 128
    %vm144 = vcmp.lt.s32.totalorder %v142, 0
    %v145 = vsub.s32 0, %v142
    %v146 = vsel %vm144, %v145, %v142
    %v147 = vshrl.u32 %v146, 5
    %v148 = vand.u32 %v146, 31
    %v149 = vsub.s32 0, %v148
    %v150 = vsel %vm144, %v149, %v148
    %vm151 = vcmp.lt.s32.totalorder %v143, 0
    %v152 = vsub.s32 0, %v143
    %v153 = vsel %vm151, %v152, %v143
    %v154 = vshrl.u32 %v153, 5
    %v155 = vand.u32 %v153, 31
    %v156 = vsub.s32 0, %v155
    %v157 = vsel %vm151, %v156, %v155
    %vm158 = vcmp.ne.s32.totalorder %v150, 0
    %vm159 = vcmp.ne.s32.totalorder %v157, 0
    %vm160 = vcmp.lt.s32.totalorder %v150, 0
    %vm161 = vcmp.lt.s32.totalorder %v157, 0
    %vm162 = vmand %vm160, %vm158
    %vm163 = vmand %vm161, %vm159
    %v164 = vadd.s32 %v150, 32
    %v165 = vadd.s32 %v157, 32
    %v166 = vsel %vm162, %v164, %v150
    %v167 = vsel %vm163, %v165, %v157
    %v168 = vld [vmem:[%s1] sm:$0xff]
    %v169 = vld [vmem:[%s1 + $0x8] sm:$0xff]
    %v170 = vld [vmem:[%s1 + $0x10] sm:$0x1]
    %v171 = vld [vmem:[%s1 + $0x18] sm:$0x1]
    %vm176 = vcmask 1040384
    %v177 = vrot.slane %v84, 7
    %v178 = vrot.slane %v85, 7
    %v179 = vsel %vm176, %v177, %v178
    %v180 = vrot.slane %v86, 7
    %v181 = vsel %vm176, %v178, %v180
    %v182 = vrot.slane %v87, 7
    %v183 = vsel %vm176, %v180, %v182
    %v188 = vsel %vm176, 0.0, %v177
    %v189 = vadd.s32 %v137, 4294967295
    %v190 = vadd.s32 %v138, 4294967295
    %v191 = vadd.s32 %v139, 4294967295
    %v192 = vadd.s32 %v140, 4294967295
    %vm193 = vcmp.ge.s32.totalorder %v189, 0
    %vm194 = vcmp.ge.s32.totalorder %v190, 0
    %vm195 = vcmp.ge.s32.totalorder %v191, 0
    %vm196 = vcmp.ge.s32.totalorder %v192, 0
    %vm197 = vcmp.lt.s32.totalorder %v189, 8
    %vm198 = vcmp.lt.s32.totalorder %v190, 8
    %vm199 = vcmp.lt.s32.totalorder %v191, 8
    %vm200 = vcmp.lt.s32.totalorder %v192, 8
    %vm201 = vmand %vm193, %vm197
    %vm202 = vmand %vm194, %vm198
    %vm203 = vmand %vm195, %vm199
    %vm204 = vmand %vm196, %vm200
    %205 = vrot.lane.b32.xlu0 %v188, 1
    %v206 = vpop.permute.xlu0 %205
    %207 = vrot.lane.b32.xlu0 %v179, 1
    %v208 = vpop.permute.xlu0 %207
    %209 = vrot.lane.b32.xlu0 %v181, 1
    %v210 = vpop.permute.xlu0 %209
    %211 = vrot.lane.b32.xlu0 %v183, 1
    %v212 = vpop.permute.xlu0 %211
    %v213 = vadd.s32 %v166, 4294967295
    %v214 = vadd.s32 %v167, 4294967295
    %vm215 = vcmp.ge.s32.totalorder %v213, 0
    %vm216 = vcmp.ge.s32.totalorder %v214, 0
    %vm217 = vcmp.lt.s32.totalorder %v213, 32
    %vm218 = vcmp.lt.s32.totalorder %v214, 32
    %vm219 = vmand %vm215, %vm217
    %vm220 = vmand %vm216, %vm218
    %vm221 = vmand %vm201, %vm219
    %vm222 = vmand %vm201, %vm220
    %vm223 = vmand %vm202, %vm219
    %vm224 = vmand %vm202, %vm220
    %vm225 = vmand %vm203, %vm219
    %vm226 = vmand %vm203, %vm220
    %vm227 = vmand %vm204, %vm219
    %vm228 = vmand %vm204, %vm220
    %v229 = vsel %vm221, %v206, 0.0
    %v230 = vsel %vm222, %v206, 0.0
    %v231 = vsel %vm223, %v208, 0.0
    %v232 = vsel %vm224, %v208, 0.0
    %v233 = vsel %vm225, %v210, 0.0
    %v234 = vsel %vm226, %v210, 0.0
    %v235 = vsel %vm227, %v212, 0.0
    %v236 = vsel %vm228, %v212, 0.0
    %v237 = vlaneseq
    %v238 = vshrl.u32 %v237, 7
    %v239 = vsub.s32 0, %v238
    %v240 = vrot.slane %v168, %v239
    %v241 = vlaneseq
    %v242 = vshrl.u32 %v241, 7
    %v243 = vsub.s32 0, %v242
    %v244 = vrot.slane %v169, %v243
    %v245 = vmul.f32 %v240, %v229
    %v246 = vmul.f32 %v244, %v230
    %v247 = vmul.f32 %v240, %v231
    %v248 = vmul.f32 %v244, %v232
    %v249 = vmul.f32 %v240, %v233
    %v250 = vmul.f32 %v244, %v234
    %v251 = vmul.f32 %v240, %v235
    %v252 = vmul.f32 %v244, %v236
    %v253 = vadd.f32 %v245, 0.0
    %v254 = vadd.f32 %v246, 0.0
    %v255 = vadd.f32 %v247, 0.0
    %v256 = vadd.f32 %v248, 0.0
    %v257 = vadd.f32 %v249, 0.0
    %v258 = vadd.f32 %v250, 0.0
    %v259 = vadd.f32 %v251, 0.0
    %v260 = vadd.f32 %v252, 0.0
    %v261 = vsel %vm201, %v188, 0.0
    %v262 = vsel %vm202, %v179, 0.0
    %v263 = vsel %vm203, %v181, 0.0
    %v264 = vsel %vm204, %v183, 0.0
    %v265 = vlaneseq
    %v266 = vshrl.u32 %v265, 7
    %v267 = vsub.s32 1, %v266
    %v268 = vrot.slane %v168, %v267
    %v269 = vlaneseq
    %v270 = vshrl.u32 %v269, 7
    %v271 = vsub.s32 1, %v270
    %v272 = vrot.slane %v169, %v271
    %v273 = vmul.f32 %v268, %v261
    %v274 = vmul.f32 %v272, %v261
    %v275 = vmul.f32 %v268, %v262
    %v276 = vmul.f32 %v272, %v262
    %v277 = vmul.f32 %v268, %v263
    %v278 = vmul.f32 %v272, %v263
    %v279 = vmul.f32 %v268, %v264
    %v280 = vmul.f32 %v272, %v264
    %v281 = vadd.f32 %v253, %v273
    %v282 = vadd.f32 %v254, %v274
    %v283 = vadd.f32 %v255, %v275
    %v284 = vadd.f32 %v256, %v276
    %v285 = vadd.f32 %v257, %v277
    %v286 = vadd.f32 %v258, %v278
    %v287 = vadd.f32 %v259, %v279
    %v288 = vadd.f32 %v260, %v280
    %289 = vrot.lane.b32.xlu0 %v188, 127
    %v290 = vpop.permute.xlu0 %289
    %291 = vrot.lane.b32.xlu0 %v179, 127
    %v292 = vpop.permute.xlu0 %291
    %293 = vrot.lane.b32.xlu0 %v181, 127
    %v294 = vpop.permute.xlu0 %293
    %295 = vrot.lane.b32.xlu0 %v183, 127
    %v296 = vpop.permute.xlu0 %295
    %v297 = vadd.s32 %v166, 1
    %v298 = vadd.s32 %v167, 1
    %vm299 = vcmp.ge.s32.totalorder %v297, 0
    %vm300 = vcmp.ge.s32.totalorder %v298, 0
    %vm301 = vcmp.lt.s32.totalorder %v297, 32
    %vm302 = vcmp.lt.s32.totalorder %v298, 32
    %vm303 = vmand %vm299, %vm301
    %vm304 = vmand %vm300, %vm302
    %vm305 = vmand %vm201, %vm303
    %vm306 = vmand %vm201, %vm304
    %vm307 = vmand %vm202, %vm303
    %vm308 = vmand %vm202, %vm304
    %vm309 = vmand %vm203, %vm303
    %vm310 = vmand %vm203, %vm304
    %vm311 = vmand %vm204, %vm303
    %vm312 = vmand %vm204, %vm304
    %v313 = vsel %vm305, %v290, 0.0
    %v314 = vsel %vm306, %v290, 0.0
    %v315 = vsel %vm307, %v292, 0.0
    %v316 = vsel %vm308, %v292, 0.0
    %v317 = vsel %vm309, %v294, 0.0
    %v318 = vsel %vm310, %v294, 0.0
    %v319 = vsel %vm311, %v296, 0.0
    %v320 = vsel %vm312, %v296, 0.0
    %v321 = vlaneseq
    %v322 = vshrl.u32 %v321, 7
    %v323 = vsub.s32 2, %v322
    %v324 = vrot.slane %v168, %v323
    %v325 = vlaneseq
    %v326 = vshrl.u32 %v325, 7
    %v327 = vsub.s32 2, %v326
    %v328 = vrot.slane %v169, %v327
    %v329 = vmul.f32 %v324, %v313
    %v330 = vmul.f32 %v328, %v314
    %v331 = vmul.f32 %v324, %v315
    %v332 = vmul.f32 %v328, %v316
    %v333 = vmul.f32 %v324, %v317
    %v334 = vmul.f32 %v328, %v318
    %v335 = vmul.f32 %v324, %v319
    %v336 = vmul.f32 %v328, %v320
    %v337 = vadd.f32 %v281, %v329
    %v338 = vadd.f32 %v282, %v330
    %v339 = vadd.f32 %v283, %v331
    %v340 = vadd.f32 %v284, %v332
    %v341 = vadd.f32 %v285, %v333
    %v342 = vadd.f32 %v286, %v334
    %v343 = vadd.f32 %v287, %v335
    %v344 = vadd.f32 %v288, %v336
    %vm345 = vcmp.ge.s32.totalorder %v137, 0
    %vm346 = vcmp.ge.s32.totalorder %v138, 0
    %vm347 = vcmp.ge.s32.totalorder %v139, 0
    %vm348 = vcmp.ge.s32.totalorder %v140, 0
    %vm349 = vcmp.lt.s32.totalorder %v137, 8
    %vm350 = vcmp.lt.s32.totalorder %v138, 8
    %vm351 = vcmp.lt.s32.totalorder %v139, 8
    %vm352 = vcmp.lt.s32.totalorder %v140, 8
    %vm353 = vmand %vm345, %vm349
    %vm354 = vmand %vm346, %vm350
    %vm355 = vmand %vm347, %vm351
    %vm356 = vmand %vm348, %vm352
    %357 = vrot.lane.b32.xlu0 %v84, 1
    %v358 = vpop.permute.xlu0 %357
    %359 = vrot.lane.b32.xlu0 %v85, 1
    %v360 = vpop.permute.xlu0 %359
    %361 = vrot.lane.b32.xlu0 %v86, 1
    %v362 = vpop.permute.xlu0 %361
    %363 = vrot.lane.b32.xlu0 %v87, 1
    %v364 = vpop.permute.xlu0 %363
    %vm365 = vmand %vm353, %vm219
    %vm366 = vmand %vm353, %vm220
    %vm367 = vmand %vm354, %vm219
    %vm368 = vmand %vm354, %vm220
    %vm369 = vmand %vm355, %vm219
    %vm370 = vmand %vm355, %vm220
    %vm371 = vmand %vm356, %vm219
    %vm372 = vmand %vm356, %vm220
    %v373 = vsel %vm365, %v358, 0.0
    %v374 = vsel %vm366, %v358, 0.0
    %v375 = vsel %vm367, %v360, 0.0
    %v376 = vsel %vm368, %v360, 0.0
    %v377 = vsel %vm369, %v362, 0.0
    %v378 = vsel %vm370, %v362, 0.0
    %v379 = vsel %vm371, %v364, 0.0
    %v380 = vsel %vm372, %v364, 0.0
    %v381 = vlaneseq
    %v382 = vshrl.u32 %v381, 7
    %v383 = vsub.s32 3, %v382
    %v384 = vrot.slane %v168, %v383
    %v385 = vlaneseq
    %v386 = vshrl.u32 %v385, 7
    %v387 = vsub.s32 3, %v386
    %v388 = vrot.slane %v169, %v387
    %v389 = vmul.f32 %v384, %v373
    %v390 = vmul.f32 %v388, %v374
    %v391 = vmul.f32 %v384, %v375
    %v392 = vmul.f32 %v388, %v376
    %v393 = vmul.f32 %v384, %v377
    %v394 = vmul.f32 %v388, %v378
    %v395 = vmul.f32 %v384, %v379
    %v396 = vmul.f32 %v388, %v380
    %v397 = vadd.f32 %v337, %v389
    %v398 = vadd.f32 %v338, %v390
    %v399 = vadd.f32 %v339, %v391
    %v400 = vadd.f32 %v340, %v392
    %v401 = vadd.f32 %v341, %v393
    %v402 = vadd.f32 %v342, %v394
    %v403 = vadd.f32 %v343, %v395
    %v404 = vadd.f32 %v344, %v396
    %v405 = vsel %vm353, %v84, 0.0
    %v406 = vsel %vm354, %v85, 0.0
    %v407 = vsel %vm355, %v86, 0.0
    %v408 = vsel %vm356, %v87, 0.0
    %v409 = vlaneseq
    %v410 = vshrl.u32 %v409, 7
    %v411 = vsub.s32 4, %v410
    %v412 = vrot.slane %v168, %v411
    %v413 = vlaneseq
    %v414 = vshrl.u32 %v413, 7
    %v415 = vsub.s32 4, %v414
    %v416 = vrot.slane %v169, %v415
    %v417 = vmul.f32 %v412, %v405
    %v418 = vmul.f32 %v416, %v405
    %v419 = vmul.f32 %v412, %v406
    %v420 = vmul.f32 %v416, %v406
    %v421 = vmul.f32 %v412, %v407
    %v422 = vmul.f32 %v416, %v407
    %v423 = vmul.f32 %v412, %v408
    %v424 = vmul.f32 %v416, %v408
    %v425 = vadd.f32 %v397, %v417
    %v426 = vadd.f32 %v398, %v418
    %v427 = vadd.f32 %v399, %v419
    %v428 = vadd.f32 %v400, %v420
    %v429 = vadd.f32 %v401, %v421
    %v430 = vadd.f32 %v402, %v422
    %v431 = vadd.f32 %v403, %v423
    %v432 = vadd.f32 %v404, %v424
    %433 = vrot.lane.b32.xlu0 %v84, 127
    %v434 = vpop.permute.xlu0 %433
    %435 = vrot.lane.b32.xlu0 %v85, 127
    %v436 = vpop.permute.xlu0 %435
    %437 = vrot.lane.b32.xlu0 %v86, 127
    %v438 = vpop.permute.xlu0 %437
    %439 = vrot.lane.b32.xlu0 %v87, 127
    %v440 = vpop.permute.xlu0 %439
    %vm441 = vmand %vm353, %vm303
    %vm442 = vmand %vm353, %vm304
    %vm443 = vmand %vm354, %vm303
    %vm444 = vmand %vm354, %vm304
    %vm445 = vmand %vm355, %vm303
    %vm446 = vmand %vm355, %vm304
    %vm447 = vmand %vm356, %vm303
    %vm448 = vmand %vm356, %vm304
    %v449 = vsel %vm441, %v434, 0.0
    %v450 = vsel %vm442, %v434, 0.0
    %v451 = vsel %vm443, %v436, 0.0
    %v452 = vsel %vm444, %v436, 0.0
    %v453 = vsel %vm445, %v438, 0.0
    %v454 = vsel %vm446, %v438, 0.0
    %v455 = vsel %vm447, %v440, 0.0
    %v456 = vsel %vm448, %v440, 0.0
    %v457 = vlaneseq
    %v458 = vshrl.u32 %v457, 7
    %v459 = vsub.s32 5, %v458
    %v460 = vrot.slane %v168, %v459
    %v461 = vlaneseq
    %v462 = vshrl.u32 %v461, 7
    %v463 = vsub.s32 5, %v462
    %v464 = vrot.slane %v169, %v463
    %v465 = vmul.f32 %v460, %v449
    %v466 = vmul.f32 %v464, %v450
    %v467 = vmul.f32 %v460, %v451
    %v468 = vmul.f32 %v464, %v452
    %v469 = vmul.f32 %v460, %v453
    %v470 = vmul.f32 %v464, %v454
    %v471 = vmul.f32 %v460, %v455
    %v472 = vmul.f32 %v464, %v456
    %v473 = vadd.f32 %v425, %v465
    %v474 = vadd.f32 %v426, %v466
    %v475 = vadd.f32 %v427, %v467
    %v476 = vadd.f32 %v428, %v468
    %v477 = vadd.f32 %v429, %v469
    %v478 = vadd.f32 %v430, %v470
    %v479 = vadd.f32 %v431, %v471
    %v480 = vadd.f32 %v432, %v472
    %vm481 = vcmask 1046528
    %v482 = vrot.slane %v84, 1
    %v483 = vrot.slane %v85, 1
    %v484 = vsel %vm481, %v482, %v483
    %v485 = vrot.slane %v86, 1
    %v486 = vsel %vm481, %v483, %v485
    %v487 = vrot.slane %v87, 1
    %v488 = vsel %vm481, %v485, %v487
    %v493 = vsel %vm481, %v487, 0.0
    %v494 = vadd.s32 %v137, 1
    %v495 = vadd.s32 %v138, 1
    %v496 = vadd.s32 %v139, 1
    %v497 = vadd.s32 %v140, 1
    %vm498 = vcmp.ge.s32.totalorder %v494, 0
    %vm499 = vcmp.ge.s32.totalorder %v495, 0
    %vm500 = vcmp.ge.s32.totalorder %v496, 0
    %vm501 = vcmp.ge.s32.totalorder %v497, 0
    %vm502 = vcmp.lt.s32.totalorder %v494, 8
    %vm503 = vcmp.lt.s32.totalorder %v495, 8
    %vm504 = vcmp.lt.s32.totalorder %v496, 8
    %vm505 = vcmp.lt.s32.totalorder %v497, 8
    %vm506 = vmand %vm498, %vm502
    %vm507 = vmand %vm499, %vm503
    %vm508 = vmand %vm500, %vm504
    %vm509 = vmand %vm501, %vm505
    %510 = vrot.lane.b32.xlu0 %v484, 1
    %v511 = vpop.permute.xlu0 %510
    %512 = vrot.lane.b32.xlu0 %v486, 1
    %v513 = vpop.permute.xlu0 %512
    %514 = vrot.lane.b32.xlu0 %v488, 1
    %v515 = vpop.permute.xlu0 %514
    %516 = vrot.lane.b32.xlu0 %v493, 1
    %v517 = vpop.permute.xlu0 %516
    %vm518 = vmand %vm506, %vm219
    %vm519 = vmand %vm506, %vm220
    %vm520 = vmand %vm507, %vm219
    %vm521 = vmand %vm507, %vm220
    %vm522 = vmand %vm508, %vm219
    %vm523 = vmand %vm508, %vm220
    %vm524 = vmand %vm509, %vm219
    %vm525 = vmand %vm509, %vm220
    %v526 = vsel %vm518, %v511, 0.0
    %v527 = vsel %vm519, %v511, 0.0
    %v528 = vsel %vm520, %v513, 0.0
    %v529 = vsel %vm521, %v513, 0.0
    %v530 = vsel %vm522, %v515, 0.0
    %v531 = vsel %vm523, %v515, 0.0
    %v532 = vsel %vm524, %v517, 0.0
    %v533 = vsel %vm525, %v517, 0.0
    %v534 = vlaneseq
    %v535 = vshrl.u32 %v534, 7
    %v536 = vsub.s32 6, %v535
    %v537 = vrot.slane %v168, %v536
    %v538 = vlaneseq
    %v539 = vshrl.u32 %v538, 7
    %v540 = vsub.s32 6, %v539
    %v541 = vrot.slane %v169, %v540
    %v542 = vmul.f32 %v537, %v526
    %v543 = vmul.f32 %v541, %v527
    %v544 = vmul.f32 %v537, %v528
    %v545 = vmul.f32 %v541, %v529
    %v546 = vmul.f32 %v537, %v530
    %v547 = vmul.f32 %v541, %v531
    %v548 = vmul.f32 %v537, %v532
    %v549 = vmul.f32 %v541, %v533
    %v550 = vadd.f32 %v473, %v542
    %v551 = vadd.f32 %v474, %v543
    %v552 = vadd.f32 %v475, %v544
    %v553 = vadd.f32 %v476, %v545
    %v554 = vadd.f32 %v477, %v546
    %v555 = vadd.f32 %v478, %v547
    %v556 = vadd.f32 %v479, %v548
    %v557 = vadd.f32 %v480, %v549
    %v558 = vsel %vm506, %v484, 0.0
    %v559 = vsel %vm507, %v486, 0.0
    %v560 = vsel %vm508, %v488, 0.0
    %v561 = vsel %vm509, %v493, 0.0
    %v562 = vlaneseq
    %v563 = vshrl.u32 %v562, 7
    %v564 = vsub.s32 7, %v563
    %v565 = vrot.slane %v168, %v564
    %v566 = vlaneseq
    %v567 = vshrl.u32 %v566, 7
    %v568 = vsub.s32 7, %v567
    %v569 = vrot.slane %v169, %v568
    %v570 = vmul.f32 %v565, %v558
    %v571 = vmul.f32 %v569, %v558
    %v572 = vmul.f32 %v565, %v559
    %v573 = vmul.f32 %v569, %v559
    %v574 = vmul.f32 %v565, %v560
    %v575 = vmul.f32 %v569, %v560
    %v576 = vmul.f32 %v565, %v561
    %v577 = vmul.f32 %v569, %v561
    %v578 = vadd.f32 %v550, %v570
    %v579 = vadd.f32 %v551, %v571
    %v580 = vadd.f32 %v552, %v572
    %v581 = vadd.f32 %v553, %v573
    %v582 = vadd.f32 %v554, %v574
    %v583 = vadd.f32 %v555, %v575
    %v584 = vadd.f32 %v556, %v576
    %v585 = vadd.f32 %v557, %v577
    %586 = vrot.lane.b32.xlu0 %v484, 127
    %v587 = vpop.permute.xlu0 %586
    %588 = vrot.lane.b32.xlu0 %v486, 127
    %v589 = vpop.permute.xlu0 %588
    %590 = vrot.lane.b32.xlu0 %v488, 127
    %v591 = vpop.permute.xlu0 %590
    %592 = vrot.lane.b32.xlu0 %v493, 127
    %v593 = vpop.permute.xlu0 %592
    %vm594 = vmand %vm506, %vm303
    %vm595 = vmand %vm506, %vm304
    %vm596 = vmand %vm507, %vm303
    %vm597 = vmand %vm507, %vm304
    %vm598 = vmand %vm508, %vm303
    %vm599 = vmand %vm508, %vm304
    %vm600 = vmand %vm509, %vm303
    %vm601 = vmand %vm509, %vm304
    %v602 = vsel %vm594, %v587, 0.0
    %v603 = vsel %vm595, %v587, 0.0
    %v604 = vsel %vm596, %v589, 0.0
    %v605 = vsel %vm597, %v589, 0.0
    %v606 = vsel %vm598, %v591, 0.0
    %v607 = vsel %vm599, %v591, 0.0
    %v608 = vsel %vm600, %v593, 0.0
    %v609 = vsel %vm601, %v593, 0.0
    %v610 = vlaneseq
    %v611 = vshrl.u32 %v610, 7
    %v612 = vsub.s32 0, %v611
    %v613 = vrot.slane %v170, %v612
    %v614 = vlaneseq
    %v615 = vshrl.u32 %v614, 7
    %v616 = vsub.s32 0, %v615
    %v617 = vrot.slane %v171, %v616
    %v618 = vmul.f32 %v613, %v602
    %v619 = vmul.f32 %v617, %v603
    %v620 = vmul.f32 %v613, %v604
    %v621 = vmul.f32 %v617, %v605
    %v622 = vmul.f32 %v613, %v606
    %v623 = vmul.f32 %v617, %v607
    %v624 = vmul.f32 %v613, %v608
    %v625 = vmul.f32 %v617, %v609
    %v626 = vadd.f32 %v578, %v618
    %v627 = vadd.f32 %v579, %v619
    %v628 = vadd.f32 %v580, %v620
    %v629 = vadd.f32 %v581, %v621
    %v630 = vadd.f32 %v582, %v622
    %v631 = vadd.f32 %v583, %v623
    %v632 = vadd.f32 %v584, %v624
    %v633 = vadd.f32 %v585, %v625
    %v634 = vld [vmem:[%s2] sm:$0x3]
    %v636 = vlaneseq
    %v637 = vshrl.u32 %v636, 7
    %v638 = vsub.s32 0, %v637
    %v639 = vrot.slane %v634, %v638
    %v640 = vlaneseq
    %v641 = vshrl.u32 %v640, 7
    %v642 = vsub.s32 1, %v641
    %v643 = vrot.slane %v634, %v642
    %v646 = vadd.f32 %v626, %v639
    %v647 = vadd.f32 %v627, %v643
    %v648 = vadd.f32 %v628, %v639
    %v649 = vadd.f32 %v629, %v643
    %v650 = vadd.f32 %v630, %v639
    %v651 = vadd.f32 %v631, %v643
    %v652 = vadd.f32 %v632, %v639
    %v653 = vadd.f32 %v633, %v643
    %v654 = vmax.f32 %v646, 0.0
    %v655 = vmax.f32 %v647, 0.0
    %v656 = vmax.f32 %v648, 0.0
    %v657 = vmax.f32 %v649, 0.0
    %v658 = vmax.f32 %v650, 0.0
    %v659 = vmax.f32 %v651, 0.0
    %v660 = vmax.f32 %v652, 0.0
    %v661 = vmax.f32 %v653, 0.0
    %v662 = vld [vmem:[%s3] sm:$0xff]
    %v663 = vld [vmem:[%s3 + $0x8] sm:$0xff]
    %v664 = vld [vmem:[%s3 + $0x10] sm:$0xff]
    %v665 = vld [vmem:[%s3 + $0x18] sm:$0xff]
    %v666 = vld [vmem:[%s3 + $0x20] sm:$0xff]
    %v667 = vld [vmem:[%s3 + $0x28] sm:$0xff]
    %v668 = vld [vmem:[%s3 + $0x30] sm:$0xff]
    %v669 = vld [vmem:[%s3 + $0x38] sm:$0xff]
    %v670 = vld [vmem:[%s3 + $0x40] sm:$0xff]
    %v671 = vld [vmem:[%s3 + $0x48] sm:$0xff]
    %v672 = vld [vmem:[%s3 + $0x50] sm:$0xff]
    %v673 = vld [vmem:[%s3 + $0x58] sm:$0xff]
    %v674 = vld [vmem:[%s3 + $0x60] sm:$0xff]
    %v675 = vld [vmem:[%s3 + $0x68] sm:$0xff]
    %v676 = vld [vmem:[%s3 + $0x70] sm:$0xff]
    %v677 = vld [vmem:[%s3 + $0x78] sm:$0xff]
    %v678 = vld [vmem:[%s3 + $0x80] sm:$0xff]
    %v679 = vld [vmem:[%s3 + $0x88] sm:$0xff]
    %v680 = vld [vmem:[%s3 + $0x90] sm:$0xff]
    %v681 = vld [vmem:[%s3 + $0x98] sm:$0xff]
    %v682 = vld [vmem:[%s3 + $0xa0] sm:$0xff]
    %v683 = vld [vmem:[%s3 + $0xa8] sm:$0xff]
    %v684 = vld [vmem:[%s3 + $0xb0] sm:$0xff]
    %v685 = vld [vmem:[%s3 + $0xb8] sm:$0xff]
    %v686 = vld [vmem:[%s3 + $0xc0] sm:$0xff]
    %v687 = vld [vmem:[%s3 + $0xc8] sm:$0xff]
    %v688 = vld [vmem:[%s3 + $0xd0] sm:$0xff]
    %v689 = vld [vmem:[%s3 + $0xd8] sm:$0xff]
    %v690 = vld [vmem:[%s3 + $0xe0] sm:$0xff]
    %v691 = vld [vmem:[%s3 + $0xe8] sm:$0xff]
    %v692 = vld [vmem:[%s3 + $0xf0] sm:$0xff]
    %v693 = vld [vmem:[%s3 + $0xf8] sm:$0xff]
    %v694 = vld [vmem:[%s4] sm:$0x1]
    %v696 = vlaneseq
    %v697 = vshrl.u32 %v696, 7
    %v698 = vsub.s32 0, %v697
    %v699 = vrot.slane %v694, %v698
    %701 = vmatprep.subr.mxu0 0.0
    %702 = vmatpush1.msra.mxu0 %v662
    %703 = vmatprep.subr.mxu0 0.0
    %704 = vmatpush1.msra.mxu0 %v663
    %705 = vmatprep.subr.mxu0 0.0
    %706 = vmatpush1.msra.mxu0 %v664
    %707 = vmatprep.subr.mxu0 0.0
    %708 = vmatpush1.msra.mxu0 %v665
    %709 = vmatprep.subr.mxu0 0.0
    %710 = vmatpush1.msra.mxu0 %v666
    %711 = vmatprep.subr.mxu0 0.0
    %712 = vmatpush1.msra.mxu0 %v667
    %713 = vmatprep.subr.mxu0 0.0
    %714 = vmatpush1.msra.mxu0 %v668
    %715 = vmatprep.subr.mxu0 0.0
    %716 = vmatpush1.msra.mxu0 %v669
    %717 = vmatprep.subr.mxu0 0.0
    %718 = vmatpush1.msra.mxu0 %v670
    %719 = vmatprep.subr.mxu0 0.0
    %720 = vmatpush1.msra.mxu0 %v671
    %721 = vmatprep.subr.mxu0 0.0
    %722 = vmatpush1.msra.mxu0 %v672
    %723 = vmatprep.subr.mxu0 0.0
    %724 = vmatpush1.msra.mxu0 %v673
    %725 = vmatprep.subr.mxu0 0.0
    %726 = vmatpush1.msra.mxu0 %v674
    %727 = vmatprep.subr.mxu0 0.0
    %728 = vmatpush1.msra.mxu0 %v675
    %729 = vmatprep.subr.mxu0 0.0
    %730 = vmatpush1.msra.mxu0 %v676
    %731 = vmatprep.subr.mxu0 0.0
    %732 = vmatpush1.msra.mxu0 %v677
    %733 = vmatprep.subr.mxu0 0.0
    %734 = vmatpush1.msra.mxu0 %v678
    %735 = vmatprep.subr.mxu0 0.0
    %736 = vmatpush1.msra.mxu0 %v679
    %737 = vmatprep.subr.mxu0 0.0
    %738 = vmatpush1.msra.mxu0 %v680
    %739 = vmatprep.subr.mxu0 0.0
    %740 = vmatpush1.msra.mxu0 %v681
    %741 = vmatprep.subr.mxu0 0.0
    %742 = vmatpush1.msra.mxu0 %v682
    %743 = vmatprep.subr.mxu0 0.0
    %744 = vmatpush1.msra.mxu0 %v683
    %745 = vmatprep.subr.mxu0 0.0
    %746 = vmatpush1.msra.mxu0 %v684
    %747 = vmatprep.subr.mxu0 0.0
    %748 = vmatpush1.msra.mxu0 %v685
    %749 = vmatprep.subr.mxu0 0.0
    %750 = vmatpush1.msra.mxu0 %v686
    %751 = vmatprep.subr.mxu0 0.0
    %752 = vmatpush1.msra.mxu0 %v687
    %753 = vmatprep.subr.mxu0 0.0
    %754 = vmatpush1.msra.mxu0 %v688
    %755 = vmatprep.subr.mxu0 0.0
    %756 = vmatpush1.msra.mxu0 %v689
    %757 = vmatprep.subr.mxu0 0.0
    %758 = vmatpush1.msra.mxu0 %v690
    %759 = vmatprep.subr.mxu0 0.0
    %760 = vmatpush1.msra.mxu0 %v691
    %761 = vmatprep.subr.mxu0 0.0
    %762 = vmatpush1.msra.mxu0 %v692
    %763 = vmatprep.subr.mxu0 0.0
    %764 = vmatpush1.msra.mxu0 %v693
    %765 = vmatprep.mubr.f32.mxu0 %v655
    %766 = vmatmul.mubr.f32.gmra.mrb[0].mxu0 %v654
    %v767 = vpop.f32.mrb[0].mxu0
    %v768 = vadd.f32 %v699, %v767
    %v769 = vpop.f32.mrb[0].mxu0
    %770 = vmatprep.mubr.f32.mxu0 %v657
    %771 = vmatmul.mubr.f32.gmra.mrb[0].mxu0 %v656
    %v772 = vpop.f32.mrb[0].mxu0
    %v773 = vadd.f32 %v699, %v772
    %v774 = vpop.f32.mrb[0].mxu0
    %775 = vmatprep.mubr.f32.mxu0 %v659
    %776 = vmatmul.mubr.f32.gmra.mrb[0].mxu0 %v658
    %v777 = vpop.f32.mrb[0].mxu0
    %v778 = vadd.f32 %v699, %v777
    %v779 = vpop.f32.mrb[0].mxu0
    %780 = vmatprep.mubr.f32.mxu0 %v661
    %781 = vmatmul.mubr.f32.gmra.mrb[0].mxu0 %v660
    %v782 = vpop.f32.mrb[0].mxu0
    %v783 = vadd.f32 %v699, %v782
    %v784 = vpop.f32.mrb[0].mxu0
    %785 = vdwg.mxu0
    %v786 = vmax.f32 %v768, 0.0
    %v787 = vmax.f32 %v773, 0.0
    %v788 = vmax.f32 %v778, 0.0
    %v789 = vmax.f32 %v783, 0.0
    %v790 = vld [vmem:[%s5] sm:$0x1]
    %v792 = vlaneseq
    %v793 = vshrl.u32 %v792, 7
    %v794 = vsub.s32 0, %v793
    %v795 = vrot.slane %v790, %v794
    %v797 = vmul.f32 %v786, %v795
    %v798 = vmul.f32 %v787, %v795
    %v799 = vmul.f32 %v788, %v795
    %v800 = vmul.f32 %v789, %v795
    %v801 = vsel %vm73, %v797, 0.0
    %802 = vadd.xlane.f32.xlu0 %v801
    %v803 = vpop.xlane.xlu0 %802
    %v804 = vsel %vm73, %v798, 0.0
    %805 = vadd.xlane.f32.xlu0 %v804
    %v806 = vpop.xlane.xlu0 %805
    %v807 = vsel %vm73, %v799, 0.0
    %808 = vadd.xlane.f32.xlu0 %v807
    %v809 = vpop.xlane.xlu0 %808
    %v810 = vsel %vm73, %v800, 0.0
    %811 = vadd.xlane.f32.xlu0 %v810
    %v812 = vpop.xlane.xlu0 %811
    %v813 = vld [vmem:[#allocation2] sm:$0x1]
    %v815 = vlaneseq
    %v816 = vshrl.u32 %v815, 7
    %v817 = vsub.s32 0, %v816
    %v818 = vrot.slane %v813, %v817
    %v820 = vadd.f32 %v803, %v818
    %v821 = vadd.f32 %v806, %v818
    %v822 = vadd.f32 %v809, %v818
    %v823 = vadd.f32 %v812, %v818
    %v824 = vsub.f32 %v654, %v658
    %v825 = vsub.f32 %v655, %v659
    %v826 = vsub.f32 %v656, %v660
    %v827 = vsub.f32 %v657, %v661
    %v828 = vsub.f32 %v820, %v822
    %v829 = vsub.f32 %v821, %v823
    %v830 = vmul.f32 %v824, %v824
    %v831 = vmul.f32 %v825, %v825
    %v832 = vmul.f32 %v826, %v826
    %v833 = vmul.f32 %v827, %v827
    %v834 = vadd.f32 %v830, %v831
    %v835 = vadd.f32 %v834, %v832
    %v836 = vadd.f32 %v835, %v833
    %837 = vadd.xlane.f32.xlu0 %v836
    %v838 = vpop.xlane.xlu0 %837
    %v839 = vrot.slane %v838, 4
    %v840 = vadd.f32 %v838, %v839
    %v841 = vrot.slane %v840, 2
    %v842 = vadd.f32 %v840, %v841
    %v843 = vrot.slane %v842, 1
    %v844 = vadd.f32 %v842, %v843
    %s845 = vtos %v844
    %s846 = smul.f32 %s845, 0.00024414063
    %v847 = vmul.f32 %v828, %v828
    %v848 = vmul.f32 %v829, %v829
    %vm849 = vcmask 7168
    %v850 = vsel %vm849, %v847, 0.0
    %v851 = vsel %vm849, %v848, 0.0
    %v852 = vadd.f32 %v850, %v851
    %853 = vadd.xlane.f32.xlu0 %v852
    %v854 = vpop.xlane.xlu0 %853
    %v855 = vrot.slane %v854, 4
    %v856 = vadd.f32 %v854, %v855
    %v857 = vrot.slane %v856, 2
    %v858 = vadd.f32 %v856, %v857
    %v859 = vrot.slane %v858, 1
    %v860 = vadd.f32 %v858, %v859
    %s861 = vtos %v860
    %s862 = smul.f32 %s861, 0.0625
    %v863 = vsel %vm849, %v828, 0.0
    %864 = vadd.xlane.f32.xlu0 %v863
    %v865 = vpop.xlane.xlu0 %864
    %v866 = vrot.slane %v865, 4
    %v867 = vadd.f32 %v865, %v866
    %v868 = vrot.slane %v867, 2
    %v869 = vadd.f32 %v867, %v868
    %v870 = vrot.slane %v869, 1
    %v871 = vadd.f32 %v869, %v870
    %s872 = vtos %v871
    %s873 = smul.f32 %s872, 0.125
    %s874 = smul.f32 %s873, %s873
    %s875 = sadd.f32 %s874, 0.0
    %v876 = vsel %vm849, %v829, 0.0
    %877 = vadd.xlane.f32.xlu0 %v876
    %v878 = vpop.xlane.xlu0 %877
    %v879 = vrot.slane %v878, 4
    %v880 = vadd.f32 %v878, %v879
    %v881 = vrot.slane %v880, 2
    %v882 = vadd.f32 %v880, %v881
    %v883 = vrot.slane %v882, 1
    %v884 = vadd.f32 %v882, %v883
    %s885 = vtos %v884
    %s886 = smul.f32 %s885, 0.125
    %s887 = smul.f32 %s886, %s886
    %s888 = sadd.f32 %s875, %s887
    %s889 = smul.f32 %s888, 0.5
    %s890 = sadd.f32 %s889, %s846
    %s891 = sadd.f32 %s890, %s862
    %s892 = smul.f32 %s891, 0.33333334
    %v893 = vstv %s892
    %vm894 = vcmask 0
    %895 = vst.msk [vmem:[#allocation3] sm:$0x1] %vm894, %v893
    // Predicated region
    $region30: #{mos_activation_loss.1} parent=1 // pred_check
      _
    $region31: #{mos_activation_loss.1} parent=1 // pred_check_branch
      %897 = sbr.rel (0) target = $region33
    $region32: #{mos_activation_loss.1} parent=1 // pred_region
      %s899 = ssub.s32 16, 16
      %900 = vsyncadd [#allocation4], %s899
      %s902 = sshll.u32 [#allocation3], 4
      %s903 = int_to_ptr.vmem [resolvable:$true] %s902
      %905 = dma.vmem_to_hbm [thread:$0]  %s903, 16, %s7, [#allocation4]
    $region33: #{mos_activation_loss.1} parent=1 // pred_fallthru
      _
    // Predicated region
    $region34: #{mos_activation_loss.1} parent=1 // pred_check
      _
    $region35: #{mos_activation_loss.1} parent=1 // pred_check_branch
      %907 = sbr.rel (0) target = $region37
    $region36: #{mos_activation_loss.1} parent=1 // pred_region
      %908 = dma.done [#allocation4], 16
    $region37: #{mos_activation_loss.1} parent=1 // pred_fallthru
      _
    %909 = vsyncpa [#allocation4], 1

</llo_original>
